<compile_context>
chip_gen: v6e
topology: v6e:2x2x1
jax: 0.10.0
libtpu: 0.0.40
codegen_flags: <defaults>
</compile_context>

<pallas_src>
import jax
import jax.numpy as jnp
from jax.experimental import pallas as pl
from jax.experimental.pallas import tpu as pltpu


# --------------------------------------------------------------------------- #
# helpers
# --------------------------------------------------------------------------- #
def _round_up(x: int, m: int) -> int:
    return (x + m - 1) // m * m


def _cdiv(a: int, b: int) -> int:
    return -(-a // b)


def _l2_normalize_f32(x: jax.Array) -> jax.Array:
    """F.normalize(x, p=2, dim=1, eps=1e-12) computed in f32."""
    x = x.astype(jnp.float32)
    inv = jax.lax.rsqrt(jnp.maximum(jnp.sum(x * x, axis=1, keepdims=True), 1e-24))
    return x * inv


_VMEM_W_BUDGET = 24 << 20  # conservative: fits v7x's 32 MiB default scoped VMEM


def _pick_class_tile(C: int, Dp: int, itemsize: int = 2) -> int:
    """Largest lane-aligned class tile whose double-buffered bf16 W fits VMEM."""
    per_buffer = _VMEM_W_BUDGET // 2                      # W is double-buffered
    max_tc = (per_buffer // (Dp * itemsize)) // 128 * 128
    max_tc = max(128, min(2048, max_tc))
    tc = min(max_tc, _round_up(C, 128))
    steps = _cdiv(C, tc)
    if steps > 1 and steps % 2 == 1:
        # Prefer an even tile count so v7x's two TensorCores split work evenly.
        tc_even = _round_up(_cdiv(C, steps + 1), 128)
        if 0 < tc_even <= max_tc:
            tc = tc_even
    return tc


# --------------------------------------------------------------------------- #
# kernels
# --------------------------------------------------------------------------- #
def _cosine_logits_kernel(zn_ref, wn_ref, o_ref):
    """Frozen-W path: both operands already L2-normalized bf16; pure MXU matmul."""
    o_ref[...] = jax.lax.dot_general(
        zn_ref[...],                      # (Bp, Dp) bf16, resident
        wn_ref[...],                      # (TC, Dp) bf16, streamed
        dimension_numbers=(((1,), (1,)), ((), ())),   # contract over D (trans-B)
        preferred_element_type=jnp.float32,
    ).astype(o_ref.dtype)


def _cosine_logits_norm_w_kernel(zn_ref, w_ref, o_ref):
    """Training path: raw bf16 W tile is row-normalized in-kernel (EUP rsqrt)."""
    w = w_ref[...].astype(jnp.float32)    # (TC, Dp)
    inv_w = jax.lax.rsqrt(
        jnp.maximum(jnp.sum(w * w, axis=-1, keepdims=True), 1e-24))
    wn = (w * inv_w).astype(jnp.bfloat16)
    o_ref[...] = jax.lax.dot_general(
        zn_ref[...],
        wn,
        dimension_numbers=(((1,), (1,)), ((), ())),
        preferred_element_type=jnp.float32,
    ).astype(o_ref.dtype)


# --------------------------------------------------------------------------- #
# wrappers
# --------------------------------------------------------------------------- #
def prepare_speaker_classifier_weights(W: jax.Array, class_tile: int | None = None):
    """Frozen/inference weights: normalize + pad + cast to bf16 ONCE.

    Returns (Wn_padded_bf16, class_tile, nb_classes); reuse across calls so the
    per-call padding/normalization HBM traffic disappears.
    """
    C, D = W.shape
    Dp = _round_up(max(D, 128), 128)
    TC = _round_up(class_tile, 128) if class_tile is not None else _pick_class_tile(C, Dp)
    Cp = _round_up(max(C, TC), TC)
    Wn = _l2_normalize_f32(W).astype(jnp.bfloat16)
    if (Cp, Dp) != (C, D):
        Wn = jnp.pad(Wn, ((0, Cp - C), (0, Dp - D)))
    return Wn, TC, C


def speaker_classifier_forward(
    Z: jax.Array,
    W: jax.Array | None = None,
    *,
    prepared_weights=None,
    class_tile: int | None = None,
) -> jax.Array:
    """Z: (B, D) -> (B, C) cosine-similarity logits.

    * prepared_weights (from prepare_speaker_classifier_weights): frozen-weight
      path; W already normalized/padded/bf16, kernel is a pure MXU matmul.
    * W (raw): training path; W is cast to bf16 and normalized inside the kernel.
    """
    B, D = Z.shape
    Dp = _round_up(max(D, 128), 128)

    if prepared_weights is not None:
        Wp, TC, C = prepared_weights
        assert Wp.shape[1] == Dp, "prepared weights feature dim mismatch"
        kernel = _cosine_logits_kernel
    else:
        assert W is not None, "pass W or prepared_weights"
        C, Dw = W.shape
        assert Dw == D, "feature dims must match"
        TC = _round_up(class_tile, 128) if class_tile is not None else _pick_class_tile(C, Dp)
        Cp_w = _round_up(max(C, TC), TC)
        Wp = W.astype(jnp.bfloat16)                   # halve streamed HBM bytes
        if (Cp_w, Dp) != (C, D):
            Wp = jnp.pad(Wp, ((0, Cp_w - C), (0, Dp - D)))
        kernel = _cosine_logits_norm_w_kernel

    Cp = Wp.shape[0]

    # Hoisted, tile-invariant Z normalization (f32 math, bf16 resident slab).
    Bp = _round_up(max(B, 16), 16)                    # bf16 MXU LHS row packing
    Zn = _l2_normalize_f32(Z).astype(jnp.bfloat16)
    if (Bp, Dp) != (B, D):
        Zn = jnp.pad(Zn, ((0, Bp - B), (0, Dp - D)))

    grid = (Cp // TC,)
    out = pl.pallas_call(
        kernel,
        out_shape=jax.ShapeDtypeStruct((Bp, Cp), jnp.float32),
        grid=grid,
        in_specs=[
            # Zn: constant index_map -> stays resident in VMEM across tiles.
            pl.BlockSpec((Bp, Dp), lambda j: (0, 0)),
            # W: one bf16 class tile per grid step, double-buffered.
            pl.BlockSpec((TC, Dp), lambda j: (j, 0)),
        ],
        out_specs=pl.BlockSpec((Bp, TC), lambda j: (0, j)),
        compiler_params=pltpu.CompilerParams(
            # Independent class tiles: shard across v7x's two TensorCores.
            dimension_semantics=("parallel",),
        ),
    )(Zn, Wp)

    if (Bp, Cp) != (B, C):
        out = out[:B, :C]
    return out


def xavier_uniform(key, nb_classes: int, input_dim: int) -> jax.Array:
    """nn.init.xavier_uniform_ for a (nb_classes, input_dim) matrix."""
    bound = (6.0 / (nb_classes + input_dim)) ** 0.5
    return jax.random.uniform(
        key, (nb_classes, input_dim), minval=-bound, maxval=bound, dtype=jnp.float32
    )


# --------------------------------------------------------------------------- #
# demo / correctness check
# --------------------------------------------------------------------------- #
if __name__ == "__main__":
    # Small shapes consistent with the module: batch=8, input_dim=32, nb_classes=16.
    B, D, C = 8, 32, 16
    key = jax.random.PRNGKey(0)
    kz, kw = jax.random.split(key)

    Z = jax.random.normal(kz, (B, D), dtype=jnp.float32)
    W = xavier_uniform(kw, C, D)  # classifier_weight

    # Pure-JAX f32 reference of the forward semantics.
    def ref(Z, W):
        zn = Z / jnp.maximum(jnp.linalg.norm(Z, axis=1, keepdims=True), 1e-12)
        wn = W / jnp.maximum(jnp.linalg.norm(W, axis=1, keepdims=True), 1e-12)
        return zn @ wn.T

    expected = ref(Z, W)

    # Training-style path: raw W, bf16 tile normalized inside the kernel.
    out_train = jax.block_until_ready(speaker_classifier_forward(Z, W))
    assert out_train.shape == (B, C)
    err_train = float(jnp.max(jnp.abs(out_train - expected)))
    assert err_train < 2e-2, f"training path mismatch, max abs err {err_train}"

    # Frozen/inference path: W normalized + padded + bf16 once, matmul-only kernel.
    prepared = prepare_speaker_classifier_weights(W)
    out_infer = jax.block_until_ready(
        speaker_classifier_forward(Z, prepared_weights=prepared))
    assert out_infer.shape == (B, C)
    err_infer = float(jnp.max(jnp.abs(out_infer - expected)))
    assert err_infer < 2e-2, f"inference path mismatch, max abs err {err_infer}"

    print("KERNEL_OK")
</pallas_src>

<mosaic_0001>
module attributes {stable_mosaic.version = 11 : i64} {
  func.func @_cosine_logits_norm_w_kernel(%arg0: i32, %arg1: memref<16x128xbf16, #tpu.memory_space<vmem>>, %arg2: memref<128x128xbf16, #tpu.memory_space<vmem>>, %arg3: memref<16x128xf32, #tpu.memory_space<vmem>>) attributes {dimension_semantics = [#tpu.dimension_semantics<parallel>], iteration_bounds = array<i64: 1>, scalar_prefetch = 0 : i64, scratch_operands = 0 : i64, tpu.core_type = #tpu.core_type<tc>, window_params = [{pipeline_mode = #tpu.pipeline_mode<synchronous>, transform_indices = @transform_0, window_bounds = array<i64: 16, 128>}, {transform_indices = @transform_1, window_bounds = array<i64: 128, 128>}, {transform_indices = @transform_2, window_bounds = array<i64: 16, 128>}]} {
    %c0 = arith.constant 0 : index
    %c0_0 = arith.constant 0 : index
    %0 = vector.load %arg2[%c0, %c0_0] : memref<128x128xbf16, #tpu.memory_space<vmem>>, vector<128x128xbf16>
    %1 = arith.extf %0 : vector<128x128xbf16> to vector<128x128xf32>
    %2 = arith.mulf %1, %1 : vector<128x128xf32>
    %cst = arith.constant dense<0.000000e+00> : vector<128xf32>
    %3 = vector.multi_reduction <add>, %2, %cst [1] : vector<128x128xf32> to vector<128xf32>
    %4 = vector.shape_cast %3 : vector<128xf32> to vector<128x1xf32>
    %cst_1 = arith.constant 1.000000e-24 : f32
    %5 = vector.broadcast %cst_1 : f32 to vector<128x1xf32>
    %6 = arith.maximumf %4, %5 : vector<128x1xf32>
    %7 = math.rsqrt %6 : vector<128x1xf32>
    %8 = vector.broadcast %7 : vector<128x1xf32> to vector<128x128xf32>
    %9 = arith.mulf %1, %8 : vector<128x128xf32>
    %10 = arith.truncf %9 : vector<128x128xf32> to vector<128x128xbf16>
    %c0_2 = arith.constant 0 : index
    %c0_3 = arith.constant 0 : index
    %11 = vector.load %arg1[%c0_2, %c0_3] : memref<16x128xbf16, #tpu.memory_space<vmem>>, vector<16x128xbf16>
    %cst_4 = arith.constant dense<0.000000e+00> : vector<16x128xf32>
    %12 = tpu.matmul %11, %10, %cst_4 {dimension_numbers = #tpu.dot_dimension_numbers<[1], [1], [0], [0], [0, 0, 1, 0], [], []>} : vector<16x128xbf16>, vector<128x128xbf16>, vector<16x128xf32> -> vector<16x128xf32>
    %c0_5 = arith.constant 0 : index
    %c0_6 = arith.constant 0 : index
    %13 = vector.load %arg3[%c0_5, %c0_6] : memref<16x128xf32, #tpu.memory_space<vmem>>, vector<16x128xf32>
    tpu.vector_store %arg3[%c0_5, %c0_6], %12 {strides = array<i32>} : memref<16x128xf32, #tpu.memory_space<vmem>>, vector<16x128xf32>,
    return
  }
  func.func @transform_0(%arg0: i32) -> (i32, i32) {
    %c0_i32 = arith.constant 0 : i32
    %c0_i32_0 = arith.constant 0 : i32
    %c0_i32_1 = arith.constant 0 : i32
    return %c0_i32, %c0_i32_0 : i32, i32
  }
  func.func @transform_1(%arg0: i32) -> (i32, i32) {
    %c0_i32 = arith.constant 0 : i32
    %c0_i32_0 = arith.constant 0 : i32
    return %arg0, %c0_i32 : i32, i32
  }
  func.func @transform_2(%arg0: i32) -> (i32, i32) {
    %c0_i32 = arith.constant 0 : i32
    %c0_i32_0 = arith.constant 0 : i32
    return %c0_i32, %arg0 : i32, i32
  }
}

</mosaic_0001>

<llo_original>
// kernel: tpu_custom_call.1
$region0: #{tpu_custom_call.1}
  #allocation0 [shape = 'u32[]', space=smem, size = 0x4, offset = 0x4, fixed_abs, tag = 'smem constant byte address 0x4 - core index']
  #allocation1 [shape = 'u32[144,128]{1,0:T(1,128)}', space=vmem, size = 0x12000, scoped, tag = 'internal scratch']
  %s0 = inlined_call_operand.hbm [shape: bf16[16,128], index: 0, kind: input, shape index: {}]
  %s1 = inlined_call_operand.hbm [shape: bf16[128,128], index: 1, kind: input, shape index: {}]
  %s2 = inlined_call_operand.hbm [shape: f32[16,128], index: 2, kind: output, shape index: {}]
  %s3 = sld [smem:[#allocation0]]
  $region26: #{tpu_custom_call.1} parent=0
    _
  %s5 = ssub.s32 1, %s3
  %s6 = scalar_select 0, %s5, %s3
  $region1: #{tpu_custom_call.1} parent=0
    #allocation2 [shape = 'u8[4096]{0}', space=vmem, size = 0x1000, scoped, tag = 'input window, operand 0, single buffered']
    #allocation3 [shape = 's32[1]{0}', space=sflag, size = 0x4, scoped, tag = 'scoped memory for tpu_custom_call.1']
    #allocation4 [shape = 's32[1]{0}', space=sflag, size = 0x4, scoped, tag = 'scoped memory for tpu_custom_call.1']
    #allocation5 [shape = 'u8[32768]{0}', space=vmem, size = 0x8000, scoped, tag = 'input window, operand 1, single buffered']
    #allocation6 [shape = 's32[1]{0}', space=sflag, size = 0x4, scoped, tag = 'scoped memory for tpu_custom_call.1']
    #allocation7 [shape = 'u8[8192]{0}', space=vmem, size = 0x2000, scoped, tag = 'output window, operand 0, single buffered']
    %7 = vsyncpa [#allocation3], 0
    %8 = vsyncpa [#allocation6], 0
    %9 = vsyncpa [#allocation4], 0
    // Predicated region
    $region2: #{tpu_custom_call.1} parent=1 // pred_check
      _
    $region3: #{tpu_custom_call.1} parent=1 // pred_check_branch
      %11 = sbr.rel (0) target = $region5
    $region4: #{tpu_custom_call.1} parent=1 // pred_region
      %s13 = ssub.s32 128, 128
      %14 = vsyncadd [#allocation3], %s13
      %s15 = sshll.u32 [#allocation2], 4
      %s16 = int_to_ptr.vmem [resolvable:$true] %s15
      %21 = dma.hbm_to_vmem [thread:$0]  %s0, 128, %s16, [#allocation3], 64, 64, 4
    $region5: #{tpu_custom_call.1} parent=1 // pred_fallthru
      _
    // Predicated region
    $region6: #{tpu_custom_call.1} parent=1 // pred_check
      _
    $region7: #{tpu_custom_call.1} parent=1 // pred_check_branch
      %23 = sbr.rel (0) target = $region9
    $region8: #{tpu_custom_call.1} parent=1 // pred_region
      %s25 = ssub.s32 1024, 1024
      %26 = vsyncadd [#allocation6], %s25
      %s27 = sshll.u32 [#allocation5], 4
      %s28 = int_to_ptr.vmem [resolvable:$true] %s27
      %33 = dma.hbm_to_vmem [thread:$0]  %s1, 1024, %s28, [#allocation6], 64, 64, 4
    $region9: #{tpu_custom_call.1} parent=1 // pred_fallthru
      _
    // Predicated region
    $region10: #{tpu_custom_call.1} parent=1 // pred_check
      _
    $region11: #{tpu_custom_call.1} parent=1 // pred_check_branch
      %35 = sbr.rel (0) target = $region13
    $region12: #{tpu_custom_call.1} parent=1 // pred_region
      %36 = dma.done [#allocation3], 128
    $region13: #{tpu_custom_call.1} parent=1 // pred_fallthru
      _
    // Predicated region
    $region14: #{tpu_custom_call.1} parent=1 // pred_check
      _
    $region15: #{tpu_custom_call.1} parent=1 // pred_check_branch
      %38 = sbr.rel (0) target = $region17
    $region16: #{tpu_custom_call.1} parent=1 // pred_region
      %39 = dma.done [#allocation6], 1024
    $region17: #{tpu_custom_call.1} parent=1 // pred_fallthru
      _
    %v41 = vld [vmem:[#allocation5] sm:$0xf]
    %v42 = vld [vmem:[#allocation5 + $0x4] sm:$0xf]
    %v43 = vld [vmem:[#allocation5 + $0x8] sm:$0xf]
    %v44 = vld [vmem:[#allocation5 + $0xc] sm:$0xf]
    %v45 = vld [vmem:[#allocation5 + $0x10] sm:$0xf]
    %v46 = vld [vmem:[#allocation5 + $0x14] sm:$0xf]
    %v47 = vld [vmem:[#allocation5 + $0x18] sm:$0xf]
    %v48 = vld [vmem:[#allocation5 + $0x1c] sm:$0xf]
    %v49 = vld [vmem:[#allocation5 + $0x20] sm:$0xf]
    %v50 = vld [vmem:[#allocation5 + $0x24] sm:$0xf]
    %v51 = vld [vmem:[#allocation5 + $0x28] sm:$0xf]
    %v52 = vld [vmem:[#allocation5 + $0x2c] sm:$0xf]
    %v53 = vld [vmem:[#allocation5 + $0x30] sm:$0xf]
    %v54 = vld [vmem:[#allocation5 + $0x34] sm:$0xf]
    %v55 = vld [vmem:[#allocation5 + $0x38] sm:$0xf]
    %v56 = vld [vmem:[#allocation5 + $0x3c] sm:$0xf]
    %v57 = vunpack.c.l.bf16 %v41
    %v58 = vunpack.c.l.bf16 %v42
    %v59 = vunpack.c.l.bf16 %v43
    %v60 = vunpack.c.l.bf16 %v44
    %v61 = vunpack.c.l.bf16 %v45
    %v62 = vunpack.c.l.bf16 %v46
    %v63 = vunpack.c.l.bf16 %v47
    %v64 = vunpack.c.l.bf16 %v48
    %v65 = vunpack.c.l.bf16 %v49
    %v66 = vunpack.c.l.bf16 %v50
    %v67 = vunpack.c.l.bf16 %v51
    %v68 = vunpack.c.l.bf16 %v52
    %v69 = vunpack.c.l.bf16 %v53
    %v70 = vunpack.c.l.bf16 %v54
    %v71 = vunpack.c.l.bf16 %v55
    %v72 = vunpack.c.l.bf16 %v56
    %v73 = vmul.f32 %v57, %v57
    %v74 = vmul.f32 %v58, %v58
    %v75 = vmul.f32 %v59, %v59
    %v76 = vmul.f32 %v60, %v60
    %v77 = vmul.f32 %v61, %v61
    %v78 = vmul.f32 %v62, %v62
    %v79 = vmul.f32 %v63, %v63
    %v80 = vmul.f32 %v64, %v64
    %v81 = vmul.f32 %v65, %v65
    %v82 = vmul.f32 %v66, %v66
    %v83 = vmul.f32 %v67, %v67
    %v84 = vmul.f32 %v68, %v68
    %v85 = vmul.f32 %v69, %v69
    %v86 = vmul.f32 %v70, %v70
    %v87 = vmul.f32 %v71, %v71
    %v88 = vmul.f32 %v72, %v72
    %89 = vadd.xlane.f32.xlu0 %v73
    %v90 = vpop.xlane.xlu0 %89
    %91 = vadd.xlane.f32.xlu0 %v74
    %v92 = vpop.xlane.xlu0 %91
    %93 = vadd.xlane.f32.xlu0 %v75
    %v94 = vpop.xlane.xlu0 %93
    %95 = vadd.xlane.f32.xlu0 %v76
    %v96 = vpop.xlane.xlu0 %95
    %97 = vadd.xlane.f32.xlu0 %v77
    %v98 = vpop.xlane.xlu0 %97
    %99 = vadd.xlane.f32.xlu0 %v78
    %v100 = vpop.xlane.xlu0 %99
    %101 = vadd.xlane.f32.xlu0 %v79
    %v102 = vpop.xlane.xlu0 %101
    %103 = vadd.xlane.f32.xlu0 %v80
    %v104 = vpop.xlane.xlu0 %103
    %105 = vadd.xlane.f32.xlu0 %v81
    %v106 = vpop.xlane.xlu0 %105
    %107 = vadd.xlane.f32.xlu0 %v82
    %v108 = vpop.xlane.xlu0 %107
    %109 = vadd.xlane.f32.xlu0 %v83
    %v110 = vpop.xlane.xlu0 %109
    %111 = vadd.xlane.f32.xlu0 %v84
    %v112 = vpop.xlane.xlu0 %111
    %113 = vadd.xlane.f32.xlu0 %v85
    %v114 = vpop.xlane.xlu0 %113
    %115 = vadd.xlane.f32.xlu0 %v86
    %v116 = vpop.xlane.xlu0 %115
    %117 = vadd.xlane.f32.xlu0 %v87
    %v118 = vpop.xlane.xlu0 %117
    %119 = vadd.xlane.f32.xlu0 %v88
    %v120 = vpop.xlane.xlu0 %119
    %v121 = vmax.f32 %v90, 1e-24
    %v122 = vmax.f32 %v92, 1e-24
    %v123 = vmax.f32 %v94, 1e-24
    %v124 = vmax.f32 %v96, 1e-24
    %v125 = vmax.f32 %v98, 1e-24
    %v126 = vmax.f32 %v100, 1e-24
    %v127 = vmax.f32 %v102, 1e-24
    %v128 = vmax.f32 %v104, 1e-24
    %v129 = vmax.f32 %v106, 1e-24
    %v130 = vmax.f32 %v108, 1e-24
    %v131 = vmax.f32 %v110, 1e-24
    %v132 = vmax.f32 %v112, 1e-24
    %v133 = vmax.f32 %v114, 1e-24
    %v134 = vmax.f32 %v116, 1e-24
    %v135 = vmax.f32 %v118, 1e-24
    %v136 = vmax.f32 %v120, 1e-24
    %v137 = vrsqrt.pop %v121
    %v138 = vrsqrt.pop %v122
    %v139 = vrsqrt.pop %v123
    %v140 = vrsqrt.pop %v124
    %v141 = vrsqrt.pop %v125
    %v142 = vrsqrt.pop %v126
    %v143 = vrsqrt.pop %v127
    %v144 = vrsqrt.pop %v128
    %v145 = vrsqrt.pop %v129
    %v146 = vrsqrt.pop %v130
    %v147 = vrsqrt.pop %v131
    %v148 = vrsqrt.pop %v132
    %v149 = vrsqrt.pop %v133
    %v150 = vrsqrt.pop %v134
    %v151 = vrsqrt.pop %v135
    %v152 = vrsqrt.pop %v136
    %v153 = vmul.f32 %v57, %v137
    %v154 = vmul.f32 %v58, %v138
    %v155 = vmul.f32 %v59, %v139
    %v156 = vmul.f32 %v60, %v140
    %v157 = vmul.f32 %v61, %v141
    %v158 = vmul.f32 %v62, %v142
    %v159 = vmul.f32 %v63, %v143
    %v160 = vmul.f32 %v64, %v144
    %v161 = vmul.f32 %v65, %v145
    %v162 = vmul.f32 %v66, %v146
    %v163 = vmul.f32 %v67, %v147
    %v164 = vmul.f32 %v68, %v148
    %v165 = vmul.f32 %v69, %v149
    %v166 = vmul.f32 %v70, %v150
    %v167 = vmul.f32 %v71, %v151
    %v168 = vmul.f32 %v72, %v152
    %v169 = vpack.c.bf16 %v154, %v153
    %v170 = vpack.c.bf16 %v156, %v155
    %v171 = vpack.c.bf16 %v158, %v157
    %v172 = vpack.c.bf16 %v160, %v159
    %v173 = vpack.c.bf16 %v162, %v161
    %v174 = vpack.c.bf16 %v164, %v163
    %v175 = vpack.c.bf16 %v166, %v165
    %v176 = vpack.c.bf16 %v168, %v167
    %v177 = vld [vmem:[#allocation2] sm:$0xf]
    %v178 = vld [vmem:[#allocation2 + $0x4] sm:$0xf]
    %v181 = vunpack.c.l.b16 %v177
    %v182 = vunpack.c.l.b16 %v178
    %v183 = vpack.c.b16 %v182, %v181
    %185 = vmatprep.subr.bf16.mxu0 0
    %186 = vmatpush1.bf16.xpose.msra.mxu0 %v176
    %187 = vmatprep.subr.bf16.mxu0 0
    %188 = vmatpush1.bf16.xpose.msra.mxu0 %v175
    %189 = vmatprep.subr.bf16.mxu0 0
    %190 = vmatpush1.bf16.xpose.msra.mxu0 %v174
    %191 = vmatprep.subr.bf16.mxu0 0
    %192 = vmatpush1.bf16.xpose.msra.mxu0 %v173
    %193 = vmatprep.subr.bf16.mxu0 0
    %194 = vmatpush1.bf16.xpose.msra.mxu0 %v172
    %195 = vmatprep.subr.bf16.mxu0 0
    %196 = vmatpush1.bf16.xpose.msra.mxu0 %v171
    %197 = vmatprep.subr.bf16.mxu0 0
    %198 = vmatpush1.bf16.xpose.msra.mxu0 %v170
    %199 = vmatprep.subr.bf16.mxu0 0
    %200 = vmatpush1.bf16.xpose.msra.mxu0 %v169
    %201 = vmatprep.subr.bf16.mxu0 0
    %202 = vmatpush2.bf16.xpose.msra.mxu0 0
    %203 = vmatprep.subr.bf16.mxu0 0
    %204 = vmatpush2.bf16.xpose.msra.mxu0 0
    %205 = vmatprep.subr.bf16.mxu0 0
    %206 = vmatpush2.bf16.xpose.msra.mxu0 0
    %207 = vmatprep.subr.bf16.mxu0 0
    %208 = vmatpush2.bf16.xpose.msra.mxu0 0
    %209 = vmatprep.subr.bf16.mxu0 0
    %210 = vmatpush2.bf16.xpose.msra.mxu0 0
    %211 = vmatprep.subr.bf16.mxu0 0
    %212 = vmatpush2.bf16.xpose.msra.mxu0 0
    %213 = vmatprep.subr.bf16.mxu0 0
    %214 = vmatpush2.bf16.xpose.msra.mxu0 0
    %215 = vmatprep.subr.bf16.mxu0 0
    %216 = vmatpush2.bf16.xpose.msra.mxu0 0
    %217 = vmatprep.mubr.bf16.mxu0 0
    %218 = vmatmul.mubr.bf16.gmra.mxu0 %v183
    %v219 = vpop.f32.mrf.mxu0
    %v220 = vadd.f32 0.0, %v219
    %v221 = vpop.f32.mrf.mxu0
    %v222 = vpop.f32.mrf.mxu0
    %v223 = vadd.f32 0.0, %v222
    %v224 = vpop.f32.mrf.mxu0
    %225 = vdwg.mxu0
    %226 = vst [vmem:[#allocation7] sm:$0xff] %v220
    %227 = vst [vmem:[#allocation7 + $0x8] sm:$0xff] %v223
    // Predicated region
    $region18: #{tpu_custom_call.1} parent=1 // pred_check
      _
    $region19: #{tpu_custom_call.1} parent=1 // pred_check_branch
      %229 = sbr.rel (0) target = $region21
    $region20: #{tpu_custom_call.1} parent=1 // pred_region
      %s231 = ssub.s32 256, 256
      %232 = vsyncadd [#allocation4], %s231
      %s233 = sshll.u32 [#allocation7], 4
      %s234 = int_to_ptr.vmem [resolvable:$true] %s233
      %239 = dma.vmem_to_hbm [thread:$0]  %s234, 256, %s2, [#allocation4], 128, 128, 8
    $region21: #{tpu_custom_call.1} parent=1 // pred_fallthru
      _
    // Predicated region
    $region22: #{tpu_custom_call.1} parent=1 // pred_check
      _
    $region23: #{tpu_custom_call.1} parent=1 // pred_check_branch
      %241 = sbr.rel (0) target = $region25
    $region24: #{tpu_custom_call.1} parent=1 // pred_region
      %242 = dma.done [#allocation4], 256
    $region25: #{tpu_custom_call.1} parent=1 // pred_fallthru
      _
    %243 = vsyncpa [#allocation3], 1
    %244 = vsyncpa [#allocation6], 1
    %245 = vsyncpa [#allocation4], 1

</llo_original>
